<compile_context>
chip_gen: v6e
topology: v6e:2x2x1
jax: 0.10.0
libtpu: 0.0.40
codegen_flags: <defaults>
</compile_context>

<pallas_src>
import functools
import math

import jax
import jax.numpy as jnp
from jax import lax
from jax.experimental import pallas as pl
from jax.experimental.pallas import tpu as pltpu


def _round_up(x: int, m: int) -> int:
    return (x + m - 1) // m * m


def _embed_kernel(ids_ref, table_ref, out_ref, *, tm: int, scale: float):
    """Gather `tm` rows from the VMEM-resident table into one output tile."""
    base = pl.program_id(0) * tm

    def body(t, carry):
        tok = ids_ref[base + t]                 # scalar read from SMEM-prefetched ids
        row = table_ref[pl.ds(tok, 1), :]       # dynamic row gather from VMEM table
        out_ref[pl.ds(t, 1), :] = row * scale   # scale folded into the store (VPU is idle)
        return carry

    lax.fori_loop(0, tm, body, 0)


def input_embeddings(token_ids: jax.Array, emb_table: jax.Array, *, tm: int = 256) -> jax.Array:
    """token_ids: [B, S] int32, emb_table: [vocab, d_model] -> [B, S, d_model]."""
    B, S = token_ids.shape
    vocab_size, d_model = emb_table.shape
    n_tok = B * S
    scale = math.sqrt(d_model)

    # Token-tile size: multiple of 8 (sublane), capped by the (padded) token count.
    tm = min(tm, _round_up(n_tok, 8))
    n_pad = _round_up(n_tok, tm)

    flat_ids = token_ids.reshape(n_tok).astype(jnp.int32)
    if n_pad != n_tok:
        flat_ids = jnp.pad(flat_ids, (0, n_pad - n_tok))  # pad rows discarded below

    itemsize = jnp.dtype(emb_table.dtype).itemsize
    table_bytes = vocab_size * d_model * itemsize
    tile_bytes = tm * d_model * itemsize
    # Table (double-buffered alloc) + output tile (double-buffered) + slack.
    vmem_need = 2 * table_bytes + 3 * tile_bytes + (1 << 20)
    # Cap at 64 MiB so the same sizing is safe on v7x (64 MiB physical VMEM).
    vmem_limit = int(min(64 * 1024 * 1024, max(16 * 1024 * 1024, vmem_need)))
    # TODO(synk): for tables too large for VMEM, switch emb_table to
    # memory_space=pl.ANY and gather rows with per-row pltpu.make_async_copy
    # into a double-buffered VMEM scratch instead of the resident-table path.

    grid_spec = pltpu.PrefetchScalarGridSpec(
        num_scalar_prefetch=1,
        grid=(n_pad // tm,),
        in_specs=[
            # Full-extent block + constant block index => DMA'd once, stays resident.
            pl.BlockSpec((vocab_size, d_model), lambda i, ids: (0, 0)),
        ],
        out_specs=pl.BlockSpec((tm, d_model), lambda i, ids: (i, 0)),
    )

    out_flat = pl.pallas_call(
        functools.partial(_embed_kernel, tm=tm, scale=scale),
        grid_spec=grid_spec,
        out_shape=jax.ShapeDtypeStruct((n_pad, d_model), emb_table.dtype),
        compiler_params=pltpu.CompilerParams(
            dimension_semantics=("parallel",),
            vmem_limit_bytes=vmem_limit,
        ),
    )(flat_ids, emb_table)

    return out_flat[:n_tok].reshape(B, S, d_model)


if __name__ == "__main__":
    # Module hyperparameters (synthetic, deterministic init — no checkpoint).
    d_model = 32
    vocab_size = 128
    batch, seq = 2, 8

    key = jax.random.PRNGKey(0)
    k_emb, k_ids = jax.random.split(key)

    # nn.Embedding default init ~ N(0, 1).
    emb_table = jax.random.normal(k_emb, (vocab_size, d_model), dtype=jnp.float32)
    token_ids = jax.random.randint(k_ids, (batch, seq), 0, vocab_size, dtype=jnp.int32)

    out = input_embeddings(token_ids, emb_table)
    out = jax.block_until_ready(out)

    # Reference check (plain JAX gather + scale).
    ref = jnp.take(emb_table, token_ids, axis=0) * math.sqrt(d_model)
    assert out.shape == (batch, seq, d_model)
    assert jnp.allclose(out, ref, atol=1e-6, rtol=1e-6)

    print("KERNEL_OK")
</pallas_src>

<mosaic_0001>
module attributes {stable_mosaic.version = 11 : i64} {
  func.func @_embed_kernel(%arg0: i32, %arg1: memref<16xi32, #tpu.memory_space<smem>>, %arg2: memref<128x32xf32, #tpu.memory_space<vmem>>, %arg3: memref<16x32xf32, #tpu.memory_space<vmem>>) attributes {dimension_semantics = [#tpu.dimension_semantics<parallel>], iteration_bounds = array<i64: 1>, scalar_prefetch = 1 : i64, scratch_operands = 0 : i64, tpu.core_type = #tpu.core_type<tc>, window_params = [{pipeline_mode = #tpu.pipeline_mode<synchronous>, transform_indices = @transform_0, window_bounds = array<i64: 128, 32>}, {transform_indices = @transform_1, window_bounds = array<i64: 16, 32>}]} {
    %c16_i32 = arith.constant 16 : i32
    %0 = arith.muli %arg0, %c16_i32 : i32
    %c0_i32 = arith.constant 0 : i32
    %c16_i32_0 = arith.constant 16 : i32
    %1 = arith.addi %c0_i32, %c16_i32_0 : i32
    %c1_i32 = arith.constant 1 : i32
    scf.for %arg4 = %c0_i32 to %1 step %c1_i32  : i32 {
      %2 = arith.addi %0, %arg4 : i32
      %3 = arith.index_cast %2 : i32 to index
      %4 = memref.load %arg1[%3] : memref<16xi32, #tpu.memory_space<smem>>
      %5 = arith.index_cast %4 : i32 to index
      %c0 = arith.constant 0 : index
      %6 = vector.load %arg2[%5, %c0] : memref<128x32xf32, #tpu.memory_space<vmem>>, vector<1x32xf32>
      %cst = arith.constant 5.65685415 : f32
      %7 = vector.broadcast %cst : f32 to vector<1x32xf32>
      %8 = arith.mulf %6, %7 : vector<1x32xf32>
      %9 = arith.index_cast %arg4 : i32 to index
      %c0_2 = arith.constant 0 : index
      %10 = vector.load %arg3[%9, %c0_2] : memref<16x32xf32, #tpu.memory_space<vmem>>, vector<1x32xf32>
      tpu.vector_store %arg3[%9, %c0_2], %8 {strides = array<i32>} : memref<16x32xf32, #tpu.memory_space<vmem>>, vector<1x32xf32>,
    }
    %c16_i32_1 = arith.constant 16 : i32
    return
  }
  func.func @transform_0(%arg0: i32, %arg1: memref<16xi32, #tpu.memory_space<smem>>) -> (i32, i32) {
    %c0_i32 = arith.constant 0 : i32
    %c0_i32_0 = arith.constant 0 : i32
    %c0_i32_1 = arith.constant 0 : i32
    return %c0_i32, %c0_i32_0 : i32, i32
  }
  func.func @transform_1(%arg0: i32, %arg1: memref<16xi32, #tpu.memory_space<smem>>) -> (i32, i32) {
    %c0_i32 = arith.constant 0 : i32
    %c0_i32_0 = arith.constant 0 : i32
    return %arg0, %c0_i32 : i32, i32
  }
}

</mosaic_0001>

<llo_original>
// kernel: tpu_custom_call.1
$region0: #{tpu_custom_call.1}
  #allocation0 [shape = 'u32[]', space=smem, size = 0x4, offset = 0x4, fixed_abs, tag = 'smem constant byte address 0x4 - core index']
  #allocation1 [shape = 'u32[144,128]{1,0:T(1,128)}', space=vmem, size = 0x12000, scoped, tag = 'internal scratch']
  #allocation2 [shape = 's32[1]{0}', space=sflag, size = 0x4, scoped, tag = 'scoped memory for tpu_custom_call.1']
  #allocation3 [shape = 'u8[512]{0}', space=smem, size = 0x200, scoped, tag = 'prefetched SMEM operand 0']
  %s0 = inlined_call_operand.vmem [shape: s32[16], index: 0, kind: input, shape index: {}]
  %s1 = inlined_call_operand.vmem [shape: f32[128,32], index: 1, kind: input, shape index: {}]
  %s2 = inlined_call_operand.hbm [shape: f32[16,32], index: 2, kind: output, shape index: {}]
  %s3 = sld [smem:[#allocation0]]
  $region21: #{tpu_custom_call.1} parent=0
    _
  %s5 = ssub.s32 1, %s3
  %s6 = scalar_select 0, %s5, %s3
  %s7 = sshll.u32 %s0, 4
  %s8 = int_to_ptr.vmem [resolvable:$true] %s7
  %10 = dma.vmem_to_smem %s8, 16, [#allocation3], [#allocation2]
  %11 = dma.done [#allocation2], 16
  %12 = sfence
  $region1: #{tpu_custom_call.1} parent=0
    #allocation4 [shape = 'u8[8192]{0}', space=vmem, size = 0x2000, scoped, tag = 'output window, operand 0, single buffered']
    #allocation5 [shape = 's32[1]{0}', space=sflag, size = 0x4, scoped, tag = 'scoped memory for tpu_custom_call.1']
    %13 = vsyncpa [#allocation5], 0
    // Predicated region
    $region2: #{tpu_custom_call.1} parent=1 // pred_check
      _
    $region3: #{tpu_custom_call.1} parent=1 // pred_check_branch
      %15 = sbr.rel (0) target = $region5
    $region4: #{tpu_custom_call.1} parent=1 // pred_region
      _
    $region5: #{tpu_custom_call.1} parent=1 // pred_fallthru
      _
    %s16 = smul.u32 0, 16
    loop: start=0, step=1, limit=16
    $region6: #{tpu_custom_call.1} parent=1 // loop_pre_header
      _
    $region7: #{tpu_custom_call.1} parent=1 // loop_header
      %s18 = sphi 0, %s22
      %p19 = scmp.ge.s32.totalorder %s18, 16
    $region8: #{tpu_custom_call.1} parent=1 // loop_header_branch
      %21 = sbr.rel (%p19) target = $region12
    $region9: #{tpu_custom_call.1} parent=1 // loop_body
      %s23 = sadd.s32 %s16, %s18
      %s24 = sld [smem:[#allocation3 + %s23]]
      %s25 = scalar_lea.vmem %s1, %s24
      %v26 = vld [vmem:[%s25] sm:$0x1]
      %v27 = vmul.f32 %v26, 5.656854
      %s28 = scalar_lea.vmem [#allocation4], %s18
      %vm29 = vcmask 253952
      %30 = vst.msk [vmem:[%s28] sm:$0x1] %vm29, %v27
    $region10: #{tpu_custom_call.1} parent=1 // loop_footer
      %s22 = sadd.s32 1, %s18
    $region11: #{tpu_custom_call.1} parent=1 // loop_footer_branch
      %17 = sbr.rel target = $region7
    $region12: #{tpu_custom_call.1} parent=1 // loop_exit
      _
    // Predicated region
    $region13: #{tpu_custom_call.1} parent=1 // pred_check
      _
    $region14: #{tpu_custom_call.1} parent=1 // pred_check_branch
      %32 = sbr.rel (0) target = $region16
    $region15: #{tpu_custom_call.1} parent=1 // pred_region
      %s34 = ssub.s32 256, 256
      %35 = vsyncadd [#allocation5], %s34
      %s36 = sshll.u32 [#allocation4], 4
      %s37 = int_to_ptr.vmem [resolvable:$true] %s36
      %42 = dma.vmem_to_hbm [thread:$0]  %s37, 256, %s2, [#allocation5], 128, 128, 8
    $region16: #{tpu_custom_call.1} parent=1 // pred_fallthru
      _
    // Predicated region
    $region17: #{tpu_custom_call.1} parent=1 // pred_check
      _
    $region18: #{tpu_custom_call.1} parent=1 // pred_check_branch
      %44 = sbr.rel (0) target = $region20
    $region19: #{tpu_custom_call.1} parent=1 // pred_region
      %45 = dma.done [#allocation5], 256
    $region20: #{tpu_custom_call.1} parent=1 // pred_fallthru
      _
    %46 = vsyncpa [#allocation5], 1

</llo_original>
